<compile_context>
chip_gen: v7x
topology: tpu7x:2x2x1
jax: 0.10.0
libtpu: 0.0.40
codegen_flags: <defaults>
</compile_context>

<pallas_src>
import functools

import jax
import jax.numpy as jnp
from jax.experimental import pallas as pl
from jax.experimental.pallas import tpu as pltpu

_LANES = 128
_MAX_BLOCK_ROWS = 512  # (512, 128) f32 tile = 256 KiB; 2 inputs x 2 bufs ~ 1 MiB VMEM


def _dice_partial_kernel(x_ref, t_ref, inter_ref, denom_ref, *,
                         total_rows, block_rows, ragged):
    x = x_ref[...].astype(jnp.float32)
    t = t_ref[...].astype(jnp.float32)
    s = jax.nn.sigmoid(x)                                   # EUP transcendental

    if ragged:  # static Python flag: only traced when the last block is partial
        row0 = pl.program_id(0) * block_rows
        rid = row0 + jax.lax.broadcasted_iota(jnp.int32, x.shape, 0)
        valid = rid < total_rows
        s = jnp.where(valid, s, 0.0)                        # also squashes any OOB garbage/NaN
        t = jnp.where(valid, t, 0.0)

    # Lane-wise partial sums (cross-sublane reduce once per block).
    inter_ref[...] = jnp.sum(s * t, axis=0, keepdims=True)
    denom_ref[...] = jnp.sum(s + t, axis=0, keepdims=True)


def dice_loss(inputs, targets, smooth=1.0):
    """Pallas-TPU DiceLoss forward. inputs/targets: any matching shape (e.g. NCHW)."""
    x = jnp.ravel(inputs)
    t = jnp.ravel(targets)
    n = x.shape[0]

    # Pad only if N is not a lane multiple (rare); sigmoid(-1e4) == 0 exactly,
    # and padded targets are 0, so padding contributes nothing.
    rem = n % _LANES
    if rem:
        pad = _LANES - rem
        x = jnp.pad(x, (0, pad), constant_values=-1e4)
        t = jnp.pad(t, (0, pad), constant_values=0)

    rows = x.shape[0] // _LANES
    x2 = x.reshape(rows, _LANES)   # free reshape of contiguous data
    t2 = t.reshape(rows, _LANES)

    block_rows = rows if rows <= _MAX_BLOCK_ROWS else _MAX_BLOCK_ROWS
    num_blocks = (rows + block_rows - 1) // block_rows
    ragged = (rows % block_rows) != 0

    tile_spec = pl.BlockSpec((block_rows, _LANES), lambda k: (k, 0))
    out_spec = pl.BlockSpec((1, _LANES), lambda k: (k, 0))

    partial_inter, partial_denom = pl.pallas_call(
        functools.partial(_dice_partial_kernel, total_rows=rows,
                          block_rows=block_rows, ragged=ragged),
        out_shape=(jax.ShapeDtypeStruct((num_blocks, _LANES), jnp.float32),
                   jax.ShapeDtypeStruct((num_blocks, _LANES), jnp.float32)),
        grid_spec=pltpu.PrefetchScalarGridSpec(
            num_scalar_prefetch=0,
            grid=(num_blocks,),
            in_specs=[tile_spec, tile_spec],
            out_specs=[out_spec, out_spec],
        ),
        compiler_params=pltpu.CompilerParams(
            dimension_semantics=("parallel",)),
    )(x2, t2)

    # Tiny epilogue in plain JAX: reduce per-block lane partials + dice formula.
    inter = jnp.sum(partial_inter)
    denom = jnp.sum(partial_denom)
    smooth = jnp.float32(smooth)
    return 1.0 - (2.0 * inter + smooth) / (denom + smooth)


def _dice_loss_ref(inputs, targets, smooth=1.0):
    p = jax.nn.sigmoid(jnp.ravel(inputs).astype(jnp.float32))
    t = jnp.ravel(targets).astype(jnp.float32)
    inter = jnp.sum(p * t)
    dice = (2.0 * inter + smooth) / (jnp.sum(p) + jnp.sum(t) + smooth)
    return 1.0 - dice


if __name__ == "__main__":
    key = jax.random.PRNGKey(0)
    k1, k2 = jax.random.split(key)
    # NCHW logits and binary targets: B=2, C=4, H=W=16
    inputs = jax.random.normal(k1, (2, 4, 16, 16), dtype=jnp.float32)
    targets = (jax.random.uniform(k2, (2, 4, 16, 16)) > 0.5).astype(jnp.float32)

    loss = jax.block_until_ready(dice_loss(inputs, targets, smooth=1.0))
    ref = jax.block_until_ready(_dice_loss_ref(inputs, targets, smooth=1.0))

    assert jnp.allclose(loss, ref, atol=1e-5, rtol=1e-5), (loss, ref)
    print("KERNEL_OK")
</pallas_src>

<mosaic_0001>
module attributes {stable_mosaic.version = 11 : i64} {
  func.func @_dice_partial_kernel(%arg0: i32, %arg1: memref<16x128xf32, #tpu.memory_space<vmem>>, %arg2: memref<16x128xf32, #tpu.memory_space<vmem>>, %arg3: memref<1x128xf32, #tpu.memory_space<vmem>>, %arg4: memref<1x128xf32, #tpu.memory_space<vmem>>) attributes {dimension_semantics = [#tpu.dimension_semantics<parallel>], iteration_bounds = array<i64: 1>, scalar_prefetch = 0 : i64, scratch_operands = 0 : i64, tpu.core_type = #tpu.core_type<tc>, window_params = [{transform_indices = @transform_0, window_bounds = array<i64: 16, 128>}, {transform_indices = @transform_1, window_bounds = array<i64: 16, 128>}, {transform_indices = @transform_2, window_bounds = array<i64: 1, 128>}, {transform_indices = @transform_3, window_bounds = array<i64: 1, 128>}]} {
    %c0 = arith.constant 0 : index
    %c0_0 = arith.constant 0 : index
    %0 = vector.load %arg1[%c0, %c0_0] : memref<16x128xf32, #tpu.memory_space<vmem>>, vector<16x128xf32>
    %c0_1 = arith.constant 0 : index
    %c0_2 = arith.constant 0 : index
    %1 = vector.load %arg2[%c0_1, %c0_2] : memref<16x128xf32, #tpu.memory_space<vmem>>, vector<16x128xf32>
    %2 = arith.negf %0 : vector<16x128xf32>
    %3 = math.exp %2 : vector<16x128xf32>
    %cst = arith.constant 1.000000e+00 : f32
    %4 = vector.broadcast %cst : f32 to vector<16x128xf32>
    %5 = arith.addf %4, %3 : vector<16x128xf32>
    %6 = arith.divf %4, %5 : vector<16x128xf32>
    %7 = arith.mulf %6, %1 : vector<16x128xf32>
    %cst_3 = arith.constant dense<0.000000e+00> : vector<128xf32>
    %8 = vector.multi_reduction <add>, %7, %cst_3 [0] : vector<16x128xf32> to vector<128xf32>
    %9 = vector.shape_cast %8 : vector<128xf32> to vector<1x128xf32>
    %c0_4 = arith.constant 0 : index
    %c0_5 = arith.constant 0 : index
    %10 = vector.load %arg3[%c0_4, %c0_5] : memref<1x128xf32, #tpu.memory_space<vmem>>, vector<1x128xf32>
    tpu.vector_store %arg3[%c0_4, %c0_5], %9 {strides = array<i32>} : memref<1x128xf32, #tpu.memory_space<vmem>>, vector<1x128xf32>,
    %11 = arith.addf %6, %1 : vector<16x128xf32>
    %cst_6 = arith.constant dense<0.000000e+00> : vector<128xf32>
    %12 = vector.multi_reduction <add>, %11, %cst_6 [0] : vector<16x128xf32> to vector<128xf32>
    %13 = vector.shape_cast %12 : vector<128xf32> to vector<1x128xf32>
    %c0_7 = arith.constant 0 : index
    %c0_8 = arith.constant 0 : index
    %14 = vector.load %arg4[%c0_7, %c0_8] : memref<1x128xf32, #tpu.memory_space<vmem>>, vector<1x128xf32>
    tpu.vector_store %arg4[%c0_7, %c0_8], %13 {strides = array<i32>} : memref<1x128xf32, #tpu.memory_space<vmem>>, vector<1x128xf32>,
    return
  }
  func.func @transform_0(%arg0: i32) -> (i32, i32) {
    %c0_i32 = arith.constant 0 : i32
    %c0_i32_0 = arith.constant 0 : i32
    return %arg0, %c0_i32 : i32, i32
  }
  func.func @transform_1(%arg0: i32) -> (i32, i32) {
    %c0_i32 = arith.constant 0 : i32
    %c0_i32_0 = arith.constant 0 : i32
    return %arg0, %c0_i32 : i32, i32
  }
  func.func @transform_2(%arg0: i32) -> (i32, i32) {
    %c0_i32 = arith.constant 0 : i32
    %c0_i32_0 = arith.constant 0 : i32
    return %arg0, %c0_i32 : i32, i32
  }
  func.func @transform_3(%arg0: i32) -> (i32, i32) {
    %c0_i32 = arith.constant 0 : i32
    %c0_i32_0 = arith.constant 0 : i32
    return %arg0, %c0_i32 : i32, i32
  }
}

</mosaic_0001>

<llo_original>
// kernel: tpu_custom_call.1
$region0: #{tpu_custom_call.1}
  #allocation0 [shape = 'u32[]', space=smem, size = 0x4, offset = 0x4, fixed_abs, tag = 'smem constant byte address 0x4 - core index']
  #allocation1 [shape = 'u32[144,128]{1,0:T(1,128)}', space=vmem, size = 0x12000, scoped, tag = 'internal scratch']
  %s0 = inlined_call_operand.hbm [shape: f32[16,128], index: 0, kind: input, shape index: {}]
  %s1 = inlined_call_operand.hbm [shape: f32[16,128], index: 1, kind: input, shape index: {}]
  %s2 = inlined_call_operand.hbm [shape: f32[1,128], index: 2, kind: output, shape index: {0}]
  %s3 = inlined_call_operand.hbm [shape: f32[1,128], index: 3, kind: output, shape index: {1}]
  %4 = xla_tuple %s2, %s3
  %s5 = sld [smem:[#allocation0]]
  $region34: #{tpu_custom_call.1} parent=0
    _
  %s7 = ssub.s32 1, %s5
  %s8 = scalar_select 0, %s7, %s5
  $region1: #{tpu_custom_call.1} parent=0
    #allocation2 [shape = 'u8[8192]{0}', space=vmem, size = 0x2000, scoped, tag = 'input window, operand 0, single buffered']
    #allocation3 [shape = 's32[1]{0}', space=sflag, size = 0x4, scoped, tag = 'scoped memory for tpu_custom_call.1']
    #allocation4 [shape = 's32[1]{0}', space=sflag, size = 0x4, scoped, tag = 'scoped memory for tpu_custom_call.1']
    #allocation5 [shape = 'u8[8192]{0}', space=vmem, size = 0x2000, scoped, tag = 'input window, operand 1, single buffered']
    #allocation6 [shape = 's32[1]{0}', space=sflag, size = 0x4, scoped, tag = 'scoped memory for tpu_custom_call.1']
    #allocation7 [shape = 'u8[512]{0}', space=vmem, size = 0x400, scoped, tag = 'output window, operand 0, single buffered']
    #allocation8 [shape = 'u8[512]{0}', space=vmem, size = 0x400, scoped, tag = 'output window, operand 1, single buffered']
    #allocation9 [shape = 's32[1]{0}', space=sflag, size = 0x4, scoped, tag = 'scoped memory for tpu_custom_call.1']
    %9 = vsyncpa [#allocation3], 0
    %10 = vsyncpa [#allocation6], 0
    %11 = vsyncpa [#allocation4], 0
    %12 = vsyncpa [#allocation9], 0
    // Predicated region
    $region2: #{tpu_custom_call.1} parent=1 // pred_check
      _
    $region3: #{tpu_custom_call.1} parent=1 // pred_check_branch
      %14 = sbr.rel (0) target = $region5
    $region4: #{tpu_custom_call.1} parent=1 // pred_region
      %s16 = ssub.s32 256, 256
      %17 = vsyncadd [#allocation3], %s16
      %s18 = sshll.u32 [#allocation2], 4
      %s19 = int_to_ptr.vmem [resolvable:$true] %s18
      %24 = dma.hbm_to_vmem [thread:$0]  %s0, 256, %s19, [#allocation3], 128, 128, 8
    $region5: #{tpu_custom_call.1} parent=1 // pred_fallthru
      _
    // Predicated region
    $region6: #{tpu_custom_call.1} parent=1 // pred_check
      _
    $region7: #{tpu_custom_call.1} parent=1 // pred_check_branch
      %26 = sbr.rel (0) target = $region9
    $region8: #{tpu_custom_call.1} parent=1 // pred_region
      %s28 = ssub.s32 256, 256
      %29 = vsyncadd [#allocation6], %s28
      %s30 = sshll.u32 [#allocation5], 4
      %s31 = int_to_ptr.vmem [resolvable:$true] %s30
      %36 = dma.hbm_to_vmem [thread:$0]  %s1, 256, %s31, [#allocation6], 128, 128, 8
    $region9: #{tpu_custom_call.1} parent=1 // pred_fallthru
      _
    // Predicated region
    $region10: #{tpu_custom_call.1} parent=1 // pred_check
      _
    $region11: #{tpu_custom_call.1} parent=1 // pred_check_branch
      %38 = sbr.rel (0) target = $region13
    $region12: #{tpu_custom_call.1} parent=1 // pred_region
      %39 = dma.done [#allocation3], 256
    $region13: #{tpu_custom_call.1} parent=1 // pred_fallthru
      _
    // Predicated region
    $region14: #{tpu_custom_call.1} parent=1 // pred_check
      _
    $region15: #{tpu_custom_call.1} parent=1 // pred_check_branch
      %41 = sbr.rel (0) target = $region17
    $region16: #{tpu_custom_call.1} parent=1 // pred_region
      %42 = dma.done [#allocation6], 256
    $region17: #{tpu_custom_call.1} parent=1 // pred_fallthru
      _
    %v43 = vld [vmem:[#allocation2] sm:$0xff]
    %v44 = vld [vmem:[#allocation2 + $0x8] sm:$0xff]
    %v45 = vld [vmem:[#allocation5] sm:$0xff]
    %v46 = vld [vmem:[#allocation5 + $0x8] sm:$0xff]
    %v47 = vxor.u32 %v43, 2147483648
    %v48 = vxor.u32 %v44, 2147483648
    %v49 = vmul.f32 %v47, 1.442695
    %v50 = vpow.pop %v49
    %v51 = vmul.f32 %v48, 1.442695
    %v52 = vpow.pop %v51
    %v53 = vadd.f32 %v50, 1.0
    %v54 = vadd.f32 %v52, 1.0
    %v55 = vrcp.pop %v53
    %v56 = vmul.f32 1.0, %v55
    %v57 = vrcp.pop %v54
    %v58 = vmul.f32 1.0, %v57
    %v59 = vmul.f32 %v56, %v45
    %v60 = vmul.f32 %v58, %v46
    %v61 = vadd.f32 %v59, %v60
    %v62 = vrot.slane %v61, 4
    %v63 = vadd.f32 %v61, %v62
    %v64 = vrot.slane %v63, 2
    %v65 = vadd.f32 %v63, %v64
    %v66 = vrot.slane %v65, 1
    %v67 = vadd.f32 %v65, %v66
    %68 = vst [vmem:[#allocation7] sm:$0x1] %v67
    %v69 = vadd.f32 %v56, %v45
    %v70 = vadd.f32 %v58, %v46
    %v71 = vadd.f32 %v69, %v70
    %v72 = vrot.slane %v71, 4
    %v73 = vadd.f32 %v71, %v72
    %v74 = vrot.slane %v73, 2
    %v75 = vadd.f32 %v73, %v74
    %v76 = vrot.slane %v75, 1
    %v77 = vadd.f32 %v75, %v76
    %78 = vst [vmem:[#allocation8] sm:$0x1] %v77
    // Predicated region
    $region18: #{tpu_custom_call.1} parent=1 // pred_check
      _
    $region19: #{tpu_custom_call.1} parent=1 // pred_check_branch
      %80 = sbr.rel (0) target = $region21
    $region20: #{tpu_custom_call.1} parent=1 // pred_region
      %s82 = ssub.s32 16, 16
      %83 = vsyncadd [#allocation4], %s82
      %s85 = sshll.u32 [#allocation7], 4
      %s86 = int_to_ptr.vmem [resolvable:$true] %s85
      %88 = dma.vmem_to_hbm [thread:$0]  %s86, 16, %s2, [#allocation4]
    $region21: #{tpu_custom_call.1} parent=1 // pred_fallthru
      _
    // Predicated region
    $region22: #{tpu_custom_call.1} parent=1 // pred_check
      _
    $region23: #{tpu_custom_call.1} parent=1 // pred_check_branch
      %90 = sbr.rel (0) target = $region25
    $region24: #{tpu_custom_call.1} parent=1 // pred_region
      %s92 = ssub.s32 16, 16
      %93 = vsyncadd [#allocation9], %s92
      %s95 = sshll.u32 [#allocation8], 4
      %s96 = int_to_ptr.vmem [resolvable:$true] %s95
      %98 = dma.vmem_to_hbm [thread:$0]  %s96, 16, %s3, [#allocation9]
    $region25: #{tpu_custom_call.1} parent=1 // pred_fallthru
      _
    // Predicated region
    $region26: #{tpu_custom_call.1} parent=1 // pred_check
      _
    $region27: #{tpu_custom_call.1} parent=1 // pred_check_branch
      %100 = sbr.rel (0) target = $region29
    $region28: #{tpu_custom_call.1} parent=1 // pred_region
      %101 = dma.done [#allocation4], 16
    $region29: #{tpu_custom_call.1} parent=1 // pred_fallthru
      _
    // Predicated region
    $region30: #{tpu_custom_call.1} parent=1 // pred_check
      _
    $region31: #{tpu_custom_call.1} parent=1 // pred_check_branch
      %103 = sbr.rel (0) target = $region33
    $region32: #{tpu_custom_call.1} parent=1 // pred_region
      %104 = dma.done [#allocation9], 16
    $region33: #{tpu_custom_call.1} parent=1 // pred_fallthru
      _
    %105 = vsyncpa [#allocation3], 1
    %106 = vsyncpa [#allocation6], 1
    %107 = vsyncpa [#allocation4], 1
    %108 = vsyncpa [#allocation9], 1

</llo_original>
